<compile_context>
chip_gen: v7x
topology: tpu7x:2x2x1
jax: 0.10.0
libtpu: 0.0.40
codegen_flags: <defaults>
</compile_context>

<pallas_src>
import functools
import math

import jax
import jax.numpy as jnp
from jax.experimental import pallas as pl
from jax.experimental.pallas import tpu as pltpu


def _round_up(x, m):
    return ((x + m - 1) // m) * m


def _agg_mean_kernel(nf_ref, ones_ref, out_ref, *, num_neighbors, emb_dim, fast_path):
    # nf_ref  : (rows, L*D) lane-dense slab of neighbor features (native dtype)
    # ones_ref: (L*D, L) constant block-ones matrix (column l is 1 on rows l*D..l*D+D-1)
    # out_ref : (rows, D) mean-aggregated output tile
    L, D = num_neighbors, emb_dim
    rows = out_ref.shape[0]
    f32 = jnp.float32

    if fast_path:
        # D divides 128 and L*D % 128 == 0: stream vreg-aligned 128-lane chunks.
        n_chunks = (L * D) // 128
        s128 = jnp.zeros((rows, 128), f32)
        nzc = jnp.zeros((rows, L), f32)
        # n_chunks is small for realistic L, D.
        # TODO(synk): switch to a bounded-unroll fori_loop if L*D/128 grows >~32.
        for c in range(n_chunks):
            xc = nf_ref[:, c * 128:(c + 1) * 128]          # aligned full-vreg slice
            s128 = s128 + xc.astype(f32)                   # VALU adds, f32 accumulation
            mc = (xc != 0).astype(ones_ref.dtype)          # compare on raw dtype
            # Per-neighbor nonzero-element counts on the idle MXU (exact: 0/1
            # products, integer-valued f32 accumulation).
            nzc = nzc + jnp.dot(mc, ones_ref[c * 128:(c + 1) * 128, :],
                                preferred_element_type=f32)
        # Fold the 128-lane partial sums down to D lanes (log2(128/D) halve+add).
        t = s128
        w = 128
        while w > D:
            w //= 2
            t = t[:, :w] + t[:, w:2 * w]
        s = t                                              # (rows, D) neighbor sum
        cnt = jnp.sum((nzc > 0).astype(f32), axis=-1, keepdims=True)
    else:
        # General-shape fallback: per-neighbor slices read straight from the ref
        # (no whole-tile cast); fine for odd D / L*D that break the chunk layout.
        s = jnp.zeros((rows, D), f32)
        cnt = jnp.zeros((rows, 1), f32)
        for l in range(L):
            xl = nf_ref[:, l * D:(l + 1) * D]
            s = s + xl.astype(f32)
            cnt = cnt + jnp.any(xl != 0, axis=-1, keepdims=True).astype(f32)

    cnt = jnp.maximum(cnt, 1.0)                            # clamp(min=1); exact divide
    out_ref[...] = (s / cnt).astype(out_ref.dtype)


def neighbor_aggregator_mean(neighbor_features, *, tile_rows=None,
                             vmem_block_budget_bytes=None):
    """neighbor_features: (B, N, L, D) -> (B, N, D) mean over non-all-zero neighbor rows."""
    B, N, L, D = neighbor_features.shape
    T = B * N
    dtype = neighbor_features.dtype
    itemsize = dtype.itemsize
    lane_pad = lambda n: _round_up(n, 128)

    # Lane-dense slab (free reshape for a dense row-major producer).
    # TODO(synk): if xprof shows a relayout copy feeding this reshape (possible
    # when D < 128 and the producer keeps a lane-padded 4-D layout), feed
    # (T, L, D) blocks directly or fuse the producer instead.
    nf_flat = neighbor_features.reshape(T, L * D)

    fast_path = (D <= 128) and (128 % D == 0) and ((L * D) % 128 == 0)

    # Constant block-ones matrix for the MXU count (0/1 values => exact at any
    # MXU precision). Built in the input dtype when it is MXU-friendly.
    mm_dtype = dtype if (dtype == jnp.float32 or dtype == jnp.bfloat16) else jnp.float32
    mm_itemsize = 2 if dtype == jnp.bfloat16 else 4
    col = jnp.arange(L * D, dtype=jnp.int32) // D
    block_ones = (col[:, None] == jnp.arange(L, dtype=jnp.int32)[None, :]).astype(mm_dtype)

    # ---- per-generation VMEM sizing -------------------------------------
    try:
        vmem_cap = int(pltpu.get_tpu_info().vmem_capacity_bytes)
    except Exception:
        vmem_cap = 64 << 20                       # conservative (v7x-sized) fallback
    if vmem_cap <= (64 << 20) + (1 << 20):        # v7x-class: 64 MiB per TensorCore
        budget_default, vmem_limit = 18 << 20, 44 << 20
    else:                                         # v5e / v6e: 128 MiB VMEM
        budget_default, vmem_limit = 56 << 20, 96 << 20
    if vmem_block_budget_bytes is None:
        vmem_block_budget_bytes = budget_default

    # ---- tile-size heuristic (budget includes blocks + in-kernel temps) --
    sub = 8 * max(1, 4 // itemsize)               # sublane packing: 8 f32 / 16 bf16 / 32 int8
    in_row_bytes = lane_pad(L * D) * itemsize
    temps_per_row = 4 * (128 * 4) + lane_pad(D) * 4 + lane_pad(L) * 4   # s128/nzc/chunk/cnt (f32)
    bytes_per_row = (2 * in_row_bytes                     # double-buffered input block
                     + 2 * lane_pad(D) * itemsize         # double-buffered output block
                     + temps_per_row)
    fixed_bytes = 2 * _round_up(L * D, 8) * lane_pad(L) * mm_itemsize   # resident block-ones
    usable = max(vmem_block_budget_bytes - fixed_bytes, 1 << 20)

    if tile_rows is None:
        if T <= 4 * sub:
            tile_rows = T                         # tiny input: one full-extent block
        else:
            fit = max(sub, (usable // bytes_per_row) // sub * sub)
            min_block_rows = _round_up(pl.cdiv(1 << 20, in_row_bytes), sub)  # blocks >= ~1 MiB
            steps_cap = _round_up(pl.cdiv(T, 8), sub)     # >= 8 steps => >= 4 per TC on v7x
            target = max(min_block_rows, steps_cap)
            tile_rows = max(sub, min(fit, target, (T // sub) * sub))
    grid = (pl.cdiv(T, tile_rows),)               # no divisibility requirement (partial last block)

    cost = pl.CostEstimate(
        flops=4 * T * L * D,                      # chunk adds + compares + mask-matmul MACs
        transcendentals=0,
        bytes_accessed=T * (L * D + D) * itemsize)

    out_flat = pl.pallas_call(
        functools.partial(_agg_mean_kernel, num_neighbors=L, emb_dim=D,
                          fast_path=fast_path),
        out_shape=jax.ShapeDtypeStruct((T, D), dtype),
        grid_spec=pltpu.PrefetchScalarGridSpec(
            num_scalar_prefetch=0,
            grid=grid,
            in_specs=[pl.BlockSpec((tile_rows, L * D), lambda i: (i, 0)),
                      pl.BlockSpec((L * D, L), lambda i: (0, 0))],   # constant, resident
            out_specs=pl.BlockSpec((tile_rows, D), lambda i: (i, 0)),
        ),
        compiler_params=pltpu.CompilerParams(
            dimension_semantics=("parallel",),
            vmem_limit_bytes=vmem_limit,
        ),
        cost_estimate=cost,
    )(nf_flat, block_ones)

    return out_flat.reshape(B, N, D)


class NeighborAggregatorJAX:
    """Parameter container mirroring the PyTorch module's __init__ (mean mode)."""

    def __init__(self, input_dim, output_dim, key, use_bias=True):
        self.input_dim = input_dim
        self.output_dim = output_dim
        self.use_bias = use_bias
        # kaiming_uniform_ default: fan_in = tensor.size(1) = output_dim,
        # gain = sqrt(2), bound = gain * sqrt(3 / fan_in)
        bound = math.sqrt(2.0) * math.sqrt(3.0 / output_dim)
        self.weight = jax.random.uniform(
            key, (input_dim, output_dim), jnp.float32, -bound, bound)
        self.bias = jnp.zeros((output_dim,), jnp.float32) if use_bias else None

    def __call__(self, neighbor_features, src_nodes=None, adj_dict_list=None):
        # 'mean' aggregation: weight/bias are unused in forward (as in PyTorch).
        # TODO(synk): 'lstm' and 'pooling' branches rely on Python dict/list
        # driven ragged packing + nn.LSTM; not implemented as a Pallas kernel.
        return neighbor_aggregator_mean(neighbor_features)


if __name__ == "__main__":
    key = jax.random.PRNGKey(0)
    k_w, k_x, k_mask = jax.random.split(key, 3)

    B, N, L, D = 2, 8, 8, 32  # batch, src nodes, max neighbors, emb dim
    module = NeighborAggregatorJAX(input_dim=D, output_dim=D, key=k_w)

    x = jax.random.normal(k_x, (B, N, L, D), jnp.float32)
    # Zero out a random subset of neighbor slots (padding rows), like real data.
    valid = jax.random.bernoulli(k_mask, p=0.6, shape=(B, N, L))
    neighbor_features = x * valid[..., None].astype(jnp.float32)

    out = jax.block_until_ready(module(neighbor_features))

    # Pure-JAX reference (mirrors the PyTorch 'mean' branch).
    neighbor_num = jnp.sum(jnp.any(neighbor_features != 0, axis=-1), axis=-1)
    ref = neighbor_features.sum(axis=2) / jnp.maximum(neighbor_num, 1)[..., None]
    assert out.shape == (B, N, D)
    assert jnp.allclose(out, ref, atol=1e-5, rtol=1e-5)

    # Ragged row count + explicit small tile -> multi-step grid with a partial
    # last block (exercises the cdiv grid path).
    B2, N2 = 2, 7
    x2 = jax.random.normal(jax.random.PRNGKey(1), (B2, N2, L, D), jnp.float32)
    v2 = jax.random.bernoulli(jax.random.PRNGKey(2), p=0.5, shape=(B2, N2, L))
    nf2 = x2 * v2[..., None].astype(jnp.float32)
    out2 = jax.block_until_ready(neighbor_aggregator_mean(nf2, tile_rows=8))
    nn2 = jnp.sum(jnp.any(nf2 != 0, axis=-1), axis=-1)
    ref2 = nf2.sum(axis=2) / jnp.maximum(nn2, 1)[..., None]
    assert out2.shape == (B2, N2, D)
    assert jnp.allclose(out2, ref2, atol=1e-5, rtol=1e-5)

    print("KERNEL_OK")
</pallas_src>

<mosaic_0001>
module attributes {stable_mosaic.version = 11 : i64} {
  func.func @_agg_mean_kernel(%arg0: i32, %arg1: memref<16x256xf32, #tpu.memory_space<vmem>>, %arg2: memref<256x8xf32, #tpu.memory_space<vmem>>, %arg3: memref<16x32xf32, #tpu.memory_space<vmem>>) attributes {dimension_semantics = [#tpu.dimension_semantics<parallel>], iteration_bounds = array<i64: 1>, scalar_prefetch = 0 : i64, scratch_operands = 0 : i64, tpu.core_type = #tpu.core_type<tc>, window_params = [{transform_indices = @transform_0, window_bounds = array<i64: 16, 256>}, {pipeline_mode = #tpu.pipeline_mode<synchronous>, transform_indices = @transform_1, window_bounds = array<i64: 256, 8>}, {transform_indices = @transform_2, window_bounds = array<i64: 16, 32>}]} {
    %cst = arith.constant 0.000000e+00 : f32
    %0 = vector.broadcast %cst : f32 to vector<16x128xf32>
    %cst_0 = arith.constant 0.000000e+00 : f32
    %1 = vector.broadcast %cst_0 : f32 to vector<16x8xf32>
    %c0 = arith.constant 0 : index
    %c0_1 = arith.constant 0 : index
    %2 = vector.load %arg1[%c0, %c0_1] : memref<16x256xf32, #tpu.memory_space<vmem>>, vector<16x128xf32>
    %3 = arith.addf %0, %2 : vector<16x128xf32>
    %cst_2 = arith.constant 0.000000e+00 : f32
    %4 = vector.broadcast %cst_2 : f32 to vector<16x128xf32>
    %5 = arith.cmpf one, %2, %4 : vector<16x128xf32>
    %6 = arith.extui %5 : vector<16x128xi1> to vector<16x128xi32>
    %7 = arith.sitofp %6 : vector<16x128xi32> to vector<16x128xf32>
    %c0_3 = arith.constant 0 : index
    %c0_4 = arith.constant 0 : index
    %8 = vector.load %arg2[%c0_3, %c0_4] : memref<256x8xf32, #tpu.memory_space<vmem>>, vector<128x8xf32>
    %cst_5 = arith.constant dense<0.000000e+00> : vector<16x8xf32>
    %9 = tpu.matmul %7, %8, %cst_5 {dimension_numbers = #tpu.dot_dimension_numbers<[1], [0], [0], [1], [0, 0, 1, 1], [], []>} : vector<16x128xf32>, vector<128x8xf32>, vector<16x8xf32> -> vector<16x8xf32>
    %10 = arith.addf %1, %9 : vector<16x8xf32>
    %c0_6 = arith.constant 0 : index
    %c128 = arith.constant 128 : index
    %11 = vector.load %arg1[%c0_6, %c128] : memref<16x256xf32, #tpu.memory_space<vmem>>, vector<16x128xf32>
    %12 = arith.addf %3, %11 : vector<16x128xf32>
    %cst_7 = arith.constant 0.000000e+00 : f32
    %13 = vector.broadcast %cst_7 : f32 to vector<16x128xf32>
    %14 = arith.cmpf one, %11, %13 : vector<16x128xf32>
    %15 = arith.extui %14 : vector<16x128xi1> to vector<16x128xi32>
    %16 = arith.sitofp %15 : vector<16x128xi32> to vector<16x128xf32>
    %c128_8 = arith.constant 128 : index
    %c0_9 = arith.constant 0 : index
    %17 = vector.load %arg2[%c128_8, %c0_9] : memref<256x8xf32, #tpu.memory_space<vmem>>, vector<128x8xf32>
    %cst_10 = arith.constant dense<0.000000e+00> : vector<16x8xf32>
    %18 = tpu.matmul %16, %17, %cst_10 {dimension_numbers = #tpu.dot_dimension_numbers<[1], [0], [0], [1], [0, 0, 1, 1], [], []>} : vector<16x128xf32>, vector<128x8xf32>, vector<16x8xf32> -> vector<16x8xf32>
    %19 = arith.addf %10, %18 : vector<16x8xf32>
    %20 = vector.extract_strided_slice %12 {offsets = [0, 0], sizes = [16, 64], strides = [1, 1]} : vector<16x128xf32> to vector<16x64xf32>
    %21 = vector.extract_strided_slice %12 {offsets = [0, 64], sizes = [16, 64], strides = [1, 1]} : vector<16x128xf32> to vector<16x64xf32>
    %22 = arith.addf %20, %21 : vector<16x64xf32>
    %23 = vector.extract_strided_slice %22 {offsets = [0, 0], sizes = [16, 32], strides = [1, 1]} : vector<16x64xf32> to vector<16x32xf32>
    %24 = vector.extract_strided_slice %22 {offsets = [0, 32], sizes = [16, 32], strides = [1, 1]} : vector<16x64xf32> to vector<16x32xf32>
    %25 = arith.addf %23, %24 : vector<16x32xf32>
    %cst_11 = arith.constant 0.000000e+00 : f32
    %26 = vector.broadcast %cst_11 : f32 to vector<16x8xf32>
    %27 = arith.cmpf ogt, %19, %26 : vector<16x8xf32>
    %28 = arith.extui %27 : vector<16x8xi1> to vector<16x8xi32>
    %29 = arith.sitofp %28 : vector<16x8xi32> to vector<16x8xf32>
    %cst_12 = arith.constant dense<0.000000e+00> : vector<16xf32>
    %30 = vector.multi_reduction <add>, %29, %cst_12 [1] : vector<16x8xf32> to vector<16xf32>
    %31 = vector.shape_cast %30 : vector<16xf32> to vector<16x1xf32>
    %cst_13 = arith.constant 1.000000e+00 : f32
    %32 = vector.broadcast %cst_13 : f32 to vector<16x1xf32>
    %33 = arith.maximumf %31, %32 : vector<16x1xf32>
    %34 = vector.broadcast %33 : vector<16x1xf32> to vector<16x32xf32>
    %35 = arith.divf %25, %34 : vector<16x32xf32>
    %c0_14 = arith.constant 0 : index
    %c0_15 = arith.constant 0 : index
    %36 = vector.load %arg3[%c0_14, %c0_15] : memref<16x32xf32, #tpu.memory_space<vmem>>, vector<16x32xf32>
    tpu.vector_store %arg3[%c0_14, %c0_15], %35 {strides = array<i32>} : memref<16x32xf32, #tpu.memory_space<vmem>>, vector<16x32xf32>,
    return
  }
  func.func @transform_0(%arg0: i32) -> (i32, i32) {
    %c0_i32 = arith.constant 0 : i32
    %c0_i32_0 = arith.constant 0 : i32
    return %arg0, %c0_i32 : i32, i32
  }
  func.func @transform_1(%arg0: i32) -> (i32, i32) {
    %c0_i32 = arith.constant 0 : i32
    %c0_i32_0 = arith.constant 0 : i32
    %c0_i32_1 = arith.constant 0 : i32
    return %c0_i32, %c0_i32_0 : i32, i32
  }
  func.func @transform_2(%arg0: i32) -> (i32, i32) {
    %c0_i32 = arith.constant 0 : i32
    %c0_i32_0 = arith.constant 0 : i32
    return %arg0, %c0_i32 : i32, i32
  }
}

</mosaic_0001>

<llo_original>
// kernel: tpu_custom_call.1
$region0: #{tpu_custom_call.1}
  #allocation0 [shape = 'u32[]', space=smem, size = 0x4, offset = 0x4, fixed_abs, tag = 'smem constant byte address 0x4 - core index']
  #allocation1 [shape = 'u32[144,128]{1,0:T(1,128)}', space=vmem, size = 0x12000, scoped, tag = 'internal scratch']
  %s0 = inlined_call_operand.vmem [shape: f32[16,256], index: 0, kind: input, shape index: {}]
  %s1 = inlined_call_operand.vmem [shape: f32[256,8], index: 1, kind: input, shape index: {}]
  %s2 = inlined_call_operand.hbm [shape: f32[16,32], index: 2, kind: output, shape index: {}]
  %s3 = sld [smem:[#allocation0]]
  $region18: #{tpu_custom_call.1} parent=0
    _
  %s5 = ssub.s32 1, %s3
  %s6 = scalar_select 0, %s5, %s3
  $region1: #{tpu_custom_call.1} parent=0
    #allocation2 [shape = 'u8[8192]{0}', space=vmem, size = 0x2000, scoped, tag = 'output window, operand 0, single buffered']
    #allocation3 [shape = 's32[1]{0}', space=sflag, size = 0x4, scoped, tag = 'scoped memory for tpu_custom_call.1']
    %7 = vsyncpa [#allocation3], 0
    // Predicated region
    $region2: #{tpu_custom_call.1} parent=1 // pred_check
      _
    $region3: #{tpu_custom_call.1} parent=1 // pred_check_branch
      %9 = sbr.rel (0) target = $region5
    $region4: #{tpu_custom_call.1} parent=1 // pred_region
      _
    $region5: #{tpu_custom_call.1} parent=1 // pred_fallthru
      _
    // Predicated region
    $region6: #{tpu_custom_call.1} parent=1 // pred_check
      _
    $region7: #{tpu_custom_call.1} parent=1 // pred_check_branch
      %11 = sbr.rel (0) target = $region9
    $region8: #{tpu_custom_call.1} parent=1 // pred_region
      _
    $region9: #{tpu_custom_call.1} parent=1 // pred_fallthru
      _
    %v12 = vld [vmem:[%s0] sm:$0xff]
    %v13 = vld [vmem:[%s0 + $0x10] sm:$0xff]
    %v14 = vadd.f32 %v12, 0.0
    %v15 = vadd.f32 %v13, 0.0
    %vm16 = vcmp.ne.f32.partialorder %v12, 0.0
    %vm17 = vcmp.ne.f32.partialorder %v13, 0.0
    %v18 = vsel %vm16, 1, 0
    %v19 = vsel %vm17, 1, 0
    %v20 = vcvt.s32.f32 %v18
    %v21 = vcvt.s32.f32 %v19
    %v22 = vld [vmem:[%s1] sm:$0xff]
    %v23 = vld [vmem:[%s1 + $0x8] sm:$0xff]
    %v24 = vld [vmem:[%s1 + $0x10] sm:$0xff]
    %v25 = vld [vmem:[%s1 + $0x18] sm:$0xff]
    %v26 = vld [vmem:[%s1 + $0x20] sm:$0xff]
    %v27 = vld [vmem:[%s1 + $0x28] sm:$0xff]
    %v28 = vld [vmem:[%s1 + $0x30] sm:$0xff]
    %v29 = vld [vmem:[%s1 + $0x38] sm:$0xff]
    %v30 = vld [vmem:[%s1 + $0x40] sm:$0xff]
    %v31 = vld [vmem:[%s1 + $0x48] sm:$0xff]
    %v32 = vld [vmem:[%s1 + $0x50] sm:$0xff]
    %v33 = vld [vmem:[%s1 + $0x58] sm:$0xff]
    %v34 = vld [vmem:[%s1 + $0x60] sm:$0xff]
    %v35 = vld [vmem:[%s1 + $0x68] sm:$0xff]
    %v36 = vld [vmem:[%s1 + $0x70] sm:$0xff]
    %v37 = vld [vmem:[%s1 + $0x78] sm:$0xff]
    %v38 = vld [vmem:[%s0 + $0x8] sm:$0xff]
    %v39 = vld [vmem:[%s0 + $0x18] sm:$0xff]
    %v40 = vadd.f32 %v14, %v38
    %v41 = vadd.f32 %v15, %v39
    %vm42 = vcmp.ne.f32.partialorder %v38, 0.0
    %vm43 = vcmp.ne.f32.partialorder %v39, 0.0
    %v44 = vsel %vm42, 1, 0
    %v45 = vsel %vm43, 1, 0
    %v46 = vcvt.s32.f32 %v44
    %v47 = vcvt.s32.f32 %v45
    %v48 = vld [vmem:[%s1 + $0x80] sm:$0xff]
    %v49 = vld [vmem:[%s1 + $0x88] sm:$0xff]
    %v50 = vld [vmem:[%s1 + $0x90] sm:$0xff]
    %v51 = vld [vmem:[%s1 + $0x98] sm:$0xff]
    %v52 = vld [vmem:[%s1 + $0xa0] sm:$0xff]
    %v53 = vld [vmem:[%s1 + $0xa8] sm:$0xff]
    %v54 = vld [vmem:[%s1 + $0xb0] sm:$0xff]
    %v55 = vld [vmem:[%s1 + $0xb8] sm:$0xff]
    %v56 = vld [vmem:[%s1 + $0xc0] sm:$0xff]
    %v57 = vld [vmem:[%s1 + $0xc8] sm:$0xff]
    %v58 = vld [vmem:[%s1 + $0xd0] sm:$0xff]
    %v59 = vld [vmem:[%s1 + $0xd8] sm:$0xff]
    %v60 = vld [vmem:[%s1 + $0xe0] sm:$0xff]
    %v61 = vld [vmem:[%s1 + $0xe8] sm:$0xff]
    %v62 = vld [vmem:[%s1 + $0xf0] sm:$0xff]
    %v63 = vld [vmem:[%s1 + $0xf8] sm:$0xff]
    %64 = vmatprep.subr.mxu0 0.0
    %65 = vmatpush1.msra.mxu0 %v48
    %66 = vmatprep.subr.mxu0 0.0
    %67 = vmatpush1.msra.mxu0 %v49
    %68 = vmatprep.subr.mxu0 0.0
    %69 = vmatpush1.msra.mxu0 %v50
    %70 = vmatprep.subr.mxu0 0.0
    %71 = vmatpush1.msra.mxu0 %v51
    %72 = vmatprep.subr.mxu0 0.0
    %73 = vmatpush1.msra.mxu0 %v52
    %74 = vmatprep.subr.mxu0 0.0
    %75 = vmatpush1.msra.mxu0 %v53
    %76 = vmatprep.subr.mxu0 0.0
    %77 = vmatpush1.msra.mxu0 %v54
    %78 = vmatprep.subr.mxu0 0.0
    %79 = vmatpush1.msra.mxu0 %v55
    %80 = vmatprep.subr.mxu0 0.0
    %81 = vmatpush1.msra.mxu0 %v56
    %82 = vmatprep.subr.mxu0 0.0
    %83 = vmatpush1.msra.mxu0 %v57
    %84 = vmatprep.subr.mxu0 0.0
    %85 = vmatpush1.msra.mxu0 %v58
    %86 = vmatprep.subr.mxu0 0.0
    %87 = vmatpush1.msra.mxu0 %v59
    %88 = vmatprep.subr.mxu0 0.0
    %89 = vmatpush1.msra.mxu0 %v60
    %90 = vmatprep.subr.mxu0 0.0
    %91 = vmatpush1.msra.mxu0 %v61
    %92 = vmatprep.subr.mxu0 0.0
    %93 = vmatpush1.msra.mxu0 %v62
    %94 = vmatprep.subr.mxu0 0.0
    %95 = vmatpush1.msra.mxu0 %v63
    %96 = vmatprep.subr.mxu0 0.0
    %97 = vmatpush1.msra.mxu0 0.0
    %98 = vmatprep.subr.mxu0 0.0
    %99 = vmatpush1.msra.mxu0 0.0
    %100 = vmatprep.subr.mxu0 0.0
    %101 = vmatpush1.msra.mxu0 0.0
    %102 = vmatprep.subr.mxu0 0.0
    %103 = vmatpush1.msra.mxu0 0.0
    %104 = vmatprep.subr.mxu0 0.0
    %105 = vmatpush1.msra.mxu0 0.0
    %106 = vmatprep.subr.mxu0 0.0
    %107 = vmatpush1.msra.mxu0 0.0
    %108 = vmatprep.subr.mxu0 0.0
    %109 = vmatpush1.msra.mxu0 0.0
    %110 = vmatprep.subr.mxu0 0.0
    %111 = vmatpush1.msra.mxu0 0.0
    %112 = vmatprep.subr.mxu0 0.0
    %113 = vmatpush1.msra.mxu0 0.0
    %114 = vmatprep.subr.mxu0 0.0
    %115 = vmatpush1.msra.mxu0 0.0
    %116 = vmatprep.subr.mxu0 0.0
    %117 = vmatpush1.msra.mxu0 0.0
    %118 = vmatprep.subr.mxu0 0.0
    %119 = vmatpush1.msra.mxu0 0.0
    %120 = vmatprep.subr.mxu0 0.0
    %121 = vmatpush1.msra.mxu0 0.0
    %122 = vmatprep.subr.mxu0 0.0
    %123 = vmatpush1.msra.mxu0 0.0
    %124 = vmatprep.subr.mxu0 0.0
    %125 = vmatpush1.msra.mxu0 0.0
    %126 = vmatprep.subr.mxu0 0.0
    %127 = vmatpush1.msra.mxu0 0.0
    %128 = vmatprep.mubr.f32.mxu0 0.0
    %129 = vmatmul.mubr.f32.gmra.mrb[0].mxu0 %v46
    %v130 = vpop.f32.mrb[0].mxu0
    %v131 = vadd.f32 0.0, %v130
    %v132 = vpop.f32.mrb[0].mxu0
    %133 = vmatprep.mubr.f32.mxu0 0.0
    %134 = vmatmul.mubr.f32.gmra.mrb[0].mxu0 %v47
    %v135 = vpop.f32.mrb[0].mxu0
    %v136 = vadd.f32 0.0, %v135
    %v137 = vpop.f32.mrb[0].mxu0
    %138 = vdwg.mxu0
    %139 = vmatprep.subr.mxu0 0.0
    %140 = vmatpush1.msra.mxu0 %v22
    %141 = vmatprep.subr.mxu0 0.0
    %142 = vmatpush1.msra.mxu0 %v23
    %143 = vmatprep.subr.mxu0 0.0
    %144 = vmatpush1.msra.mxu0 %v24
    %145 = vmatprep.subr.mxu0 0.0
    %146 = vmatpush1.msra.mxu0 %v25
    %147 = vmatprep.subr.mxu0 0.0
    %148 = vmatpush1.msra.mxu0 %v26
    %149 = vmatprep.subr.mxu0 0.0
    %150 = vmatpush1.msra.mxu0 %v27
    %151 = vmatprep.subr.mxu0 0.0
    %152 = vmatpush1.msra.mxu0 %v28
    %153 = vmatprep.subr.mxu0 0.0
    %154 = vmatpush1.msra.mxu0 %v29
    %155 = vmatprep.subr.mxu0 0.0
    %156 = vmatpush1.msra.mxu0 %v30
    %157 = vmatprep.subr.mxu0 0.0
    %158 = vmatpush1.msra.mxu0 %v31
    %159 = vmatprep.subr.mxu0 0.0
    %160 = vmatpush1.msra.mxu0 %v32
    %161 = vmatprep.subr.mxu0 0.0
    %162 = vmatpush1.msra.mxu0 %v33
    %163 = vmatprep.subr.mxu0 0.0
    %164 = vmatpush1.msra.mxu0 %v34
    %165 = vmatprep.subr.mxu0 0.0
    %166 = vmatpush1.msra.mxu0 %v35
    %167 = vmatprep.subr.mxu0 0.0
    %168 = vmatpush1.msra.mxu0 %v36
    %169 = vmatprep.subr.mxu0 0.0
    %170 = vmatpush1.msra.mxu0 %v37
    %171 = vmatprep.subr.mxu0 0.0
    %172 = vmatpush1.msra.mxu0 0.0
    %173 = vmatprep.subr.mxu0 0.0
    %174 = vmatpush1.msra.mxu0 0.0
    %175 = vmatprep.subr.mxu0 0.0
    %176 = vmatpush1.msra.mxu0 0.0
    %177 = vmatprep.subr.mxu0 0.0
    %178 = vmatpush1.msra.mxu0 0.0
    %179 = vmatprep.subr.mxu0 0.0
    %180 = vmatpush1.msra.mxu0 0.0
    %181 = vmatprep.subr.mxu0 0.0
    %182 = vmatpush1.msra.mxu0 0.0
    %183 = vmatprep.subr.mxu0 0.0
    %184 = vmatpush1.msra.mxu0 0.0
    %185 = vmatprep.subr.mxu0 0.0
    %186 = vmatpush1.msra.mxu0 0.0
    %187 = vmatprep.subr.mxu0 0.0
    %188 = vmatpush1.msra.mxu0 0.0
    %189 = vmatprep.subr.mxu0 0.0
    %190 = vmatpush1.msra.mxu0 0.0
    %191 = vmatprep.subr.mxu0 0.0
    %192 = vmatpush1.msra.mxu0 0.0
    %193 = vmatprep.subr.mxu0 0.0
    %194 = vmatpush1.msra.mxu0 0.0
    %195 = vmatprep.subr.mxu0 0.0
    %196 = vmatpush1.msra.mxu0 0.0
    %197 = vmatprep.subr.mxu0 0.0
    %198 = vmatpush1.msra.mxu0 0.0
    %199 = vmatprep.subr.mxu0 0.0
    %200 = vmatpush1.msra.mxu0 0.0
    %201 = vmatprep.subr.mxu0 0.0
    %202 = vmatpush1.msra.mxu0 0.0
    %203 = vmatprep.mubr.f32.mxu0 0.0
    %204 = vmatmul.mubr.f32.gmra.mrb[0].mxu0 %v20
    %v205 = vpop.f32.mrb[0].mxu0
    %v206 = vadd.f32 %v131, %v205
    %v207 = vpop.f32.mrb[0].mxu0
    %208 = vmatprep.mubr.f32.mxu0 0.0
    %209 = vmatmul.mubr.f32.gmra.mrb[0].mxu0 %v21
    %v210 = vpop.f32.mrb[0].mxu0
    %v211 = vadd.f32 %v136, %v210
    %v212 = vpop.f32.mrb[0].mxu0
    %213 = vdwg.mxu0
    %216 = vrot.lane.b32.xlu0 %v40, 64
    %v217 = vpop.permute.xlu0 %216
    %218 = vrot.lane.b32.xlu0 %v41, 64
    %v219 = vpop.permute.xlu0 %218
    %v222 = vadd.f32 %v40, %v217
    %v223 = vadd.f32 %v41, %v219
    %226 = vrot.lane.b32.xlu0 %v222, 96
    %v227 = vpop.permute.xlu0 %226
    %228 = vrot.lane.b32.xlu0 %v223, 96
    %v229 = vpop.permute.xlu0 %228
    %v232 = vadd.f32 %v222, %v227
    %v233 = vadd.f32 %v223, %v229
    %vm234 = vcmp.gt.f32.partialorder %v206, 0.0
    %vm235 = vcmp.gt.f32.partialorder %v211, 0.0
    %v236 = vsel %vm234, 1, 0
    %v237 = vsel %vm235, 1, 0
    %v238 = vcvt.s32.f32 %v236
    %v239 = vcvt.s32.f32 %v237
    %vm240 = vcmask 64512
    %v241 = vsel %vm240, %v238, 0.0
    %242 = vadd.xlane.f32.xlu0 %v241
    %v243 = vpop.xlane.xlu0 %242
    %v244 = vsel %vm240, %v239, 0.0
    %245 = vadd.xlane.f32.xlu0 %v244
    %v246 = vpop.xlane.xlu0 %245
    %v247 = vmax.f32 %v243, 1.0
    %v248 = vmax.f32 %v246, 1.0
    %v249 = vrcp.pop %v247
    %v250 = vmul.f32 %v232, %v249
    %v251 = vrcp.pop %v248
    %v252 = vmul.f32 %v233, %v251
    %vm253 = vcmask 261120
    %254 = vst.msk [vmem:[#allocation2] sm:$0xff] %vm253, %v250
    %255 = vst.msk [vmem:[#allocation2 + $0x8] sm:$0xff] %vm253, %v252
    // Predicated region
    $region10: #{tpu_custom_call.1} parent=1 // pred_check
      _
    $region11: #{tpu_custom_call.1} parent=1 // pred_check_branch
      %257 = sbr.rel (0) target = $region13
    $region12: #{tpu_custom_call.1} parent=1 // pred_region
      %s259 = ssub.s32 256, 256
      %260 = vsyncadd [#allocation3], %s259
      %s261 = sshll.u32 [#allocation2], 4
      %s262 = int_to_ptr.vmem [resolvable:$true] %s261
      %267 = dma.vmem_to_hbm [thread:$0]  %s262, 256, %s2, [#allocation3], 128, 128, 8
    $region13: #{tpu_custom_call.1} parent=1 // pred_fallthru
      _
    // Predicated region
    $region14: #{tpu_custom_call.1} parent=1 // pred_check
      _
    $region15: #{tpu_custom_call.1} parent=1 // pred_check_branch
      %269 = sbr.rel (0) target = $region17
    $region16: #{tpu_custom_call.1} parent=1 // pred_region
      %270 = dma.done [#allocation3], 256
    $region17: #{tpu_custom_call.1} parent=1 // pred_fallthru
      _
    %271 = vsyncpa [#allocation3], 1

</llo_original>
